<compile_context>
chip_gen: v6e
topology: v6e:2x2x1
jax: 0.10.0
libtpu: 0.0.40
codegen_flags: <defaults>
</compile_context>

<pallas_src>
import functools

import jax
import jax.numpy as jnp
from jax.experimental import pallas as pl
from jax.experimental.pallas import tpu as pltpu

_MIB = 1024 * 1024


def _rmsnorm_kernel(x_ref, w_ref, o_ref, *, eps: float):
    # NOTE(ragged-tail safety): the hidden (lane) axis is never tiled -- every
    # block spans the full `dim`, so only the row axis can be ragged.  Padded
    # rows in the last block hold undefined VMEM data, which is safe only
    # because the math below is strictly per-row and out-of-bounds stores are
    # clipped.  Do NOT start tiling `dim` without adding explicit masking.
    xf = x_ref[...].astype(jnp.float32)                 # (tile_rows, dim)  VPU cast
    ms = jnp.mean(xf * xf, axis=-1, keepdims=True)      # (tile_rows, 1)    XLU lane reduce
    inv = jax.lax.rsqrt(ms + eps)                       # EUP
    # Recompute the f32 cast for the store instead of reusing `xf`, so a full
    # casted tile is not kept live across the reduce (~1 f32 temp, not 2).
    o_ref[...] = ((x_ref[...].astype(jnp.float32) * inv) * w_ref[...]).astype(o_ref.dtype)


def _vmem_budget_bytes() -> int:
    """~80% of half of per-core physical VMEM; conservative fallback if query fails."""
    try:
        physical = pltpu.get_tpu_info().vmem_capacity_bytes
    except Exception:
        physical = 64 * _MIB  # v7x per-TensorCore size -- safe everywhere
    if not physical or physical <= 0:
        physical = 64 * _MIB
    # Half for this kernel, with ~20% headroom in case Mosaic materializes an
    # extra full-tile temporary (tightest on v7x where VMEM is only 64 MiB).
    return int(physical // 2 * 0.8)


def _round_up(n: int, g: int) -> int:
    return ((n + g - 1) // g) * g


def _per_row_vmem_bytes(dim: int, itemsize: int) -> int:
    # Double-buffered input + double-buffered output (same dtype) + ~1 f32
    # temporary materialized by the body (the casted tile used for the reduce).
    return dim * (2 * itemsize + 2 * itemsize + 4)


def _pick_tile_rows(rows: int, dim: int, itemsize: int, budget: int) -> int:
    """Row tile: largest power-of-two <= 512 fitting `budget`, with grid-length clamps."""
    per_row = _per_row_vmem_bytes(dim, itemsize)
    # Full sublane packing: 8 rows for f32, 16 for bf16, 32 for int8.
    gran = max(8, 32 // max(itemsize, 1))
    limit = max(budget // max(per_row, 1), gran)
    # Cap at 512: measured mem-bound plateau on v6e (512 ~85% vs 1024 ~86% of
    # roofline); halves buffering and keeps the grid long (better tail/pipeline).
    tile = gran
    while tile * 2 <= min(limit, 512):
        tile *= 2
    # Keep the grid long enough to (a) pipeline at all (>= 2 steps: overlap the
    # i+1 read with the i-1 writeback) and (b) shard across both TensorCores on
    # v7x megacore with some balance (>= 4 steps when rows allow it).
    if rows > 4 * gran:
        tile = min(tile, _round_up(-(-rows // 4), gran))
    elif rows > 2 * gran:
        tile = min(tile, _round_up(-(-rows // 2), gran))
    # Don't tile past the data we actually have (rounded up to sublane packing).
    rows_rounded = _round_up(rows, gran)
    return max(min(tile, rows_rounded), gran)


def gemma_rms_norm(x: jax.Array, weight: jax.Array, eps: float = 1e-6,
                   tile_rows: int | None = None) -> jax.Array:
    """RMSNorm over the last axis of x. x: [..., dim], weight: [dim]."""
    orig_shape = x.shape
    dim = orig_shape[-1]
    assert weight.shape == (dim,)

    x2d = x.reshape(-1, dim)            # collapsing leading dims is free
    rows = x2d.shape[0]
    itemsize = jnp.dtype(x.dtype).itemsize

    budget = _vmem_budget_bytes()
    if tile_rows is None:
        tile_rows = _pick_tile_rows(rows, dim, itemsize, budget)

    # Fold the "+1" into the weight once, in f32, on the wrapper side.
    w2d = (1.0 + weight.astype(jnp.float32)).reshape(1, dim)

    grid = (pl.cdiv(rows, tile_rows),)  # ragged row tail handled by Pallas masking

    # Right-size the scoped-VMEM limit: actual pipeline need + headroom (leaves
    # room for XLA to schedule neighboring fusions), never starving the pipeline.
    pipeline_bytes = tile_rows * _per_row_vmem_bytes(dim, itemsize) + 2 * dim * 4
    vmem_limit = int(min(max(pipeline_bytes * 1.5, 16 * _MIB), budget))
    vmem_limit = max(vmem_limit, int(pipeline_bytes * 1.25))

    # Advisory cost: this op is pure HBM traffic (square, reduce-add, 2 muls).
    cost = pl.CostEstimate(
        flops=4 * rows * dim,
        transcendentals=rows,                              # one rsqrt per row
        bytes_accessed=2 * rows * dim * itemsize + 4 * dim,
    )

    out2d = pl.pallas_call(
        functools.partial(_rmsnorm_kernel, eps=eps),
        out_shape=jax.ShapeDtypeStruct((rows, dim), x.dtype),
        grid_spec=pltpu.PrefetchScalarGridSpec(
            num_scalar_prefetch=0,
            grid=grid,
            in_specs=[
                pl.BlockSpec((tile_rows, dim), lambda i: (i, 0)),
                pl.BlockSpec((1, dim), lambda i: (0, 0)),   # resident (1+w) block
            ],
            out_specs=pl.BlockSpec((tile_rows, dim), lambda i: (i, 0)),
        ),
        compiler_params=pltpu.CompilerParams(
            dimension_semantics=("parallel",),   # megacore-shard the row grid (v7x)
            vmem_limit_bytes=vmem_limit,
        ),
        cost_estimate=cost,
    )(x2d, w2d)

    return out2d.reshape(orig_shape)


def gemma_rms_norm_ref(x, weight, eps=1e-6):
    xf = x.astype(jnp.float32)
    norm = xf * jax.lax.rsqrt(jnp.mean(xf * xf, axis=-1, keepdims=True) + eps)
    out = norm * (1.0 + weight.astype(jnp.float32))
    return out.astype(x.dtype)


if __name__ == "__main__":
    key = jax.random.PRNGKey(0)
    kx, kw = jax.random.split(key)

    # Small shapes; hidden is a multiple of 128 for lane-dense stores, and
    # rows = 128 exercises a multi-step (pipelined / megacore-shardable) grid.
    batch, seq, hidden = 2, 64, 256
    # bfloat16 activations to exercise the float() / type_as() casting path.
    x = jax.random.normal(kx, (batch, seq, hidden), dtype=jnp.float32).astype(jnp.bfloat16)
    # GemmaRMSNorm initializes weight to zeros; perturb deterministically so the
    # (1 + weight) term is actually exercised.
    weight = 0.1 * jax.random.normal(kw, (hidden,), dtype=jnp.float32)

    out = gemma_rms_norm(x, weight, eps=1e-6)
    out = jax.block_until_ready(out)

    ref = gemma_rms_norm_ref(x, weight, eps=1e-6)
    assert out.shape == x.shape and out.dtype == x.dtype
    assert jnp.allclose(out.astype(jnp.float32), ref.astype(jnp.float32),
                        atol=1e-2, rtol=1e-2)

    print("KERNEL_OK")
</pallas_src>

<mosaic_0001>
module attributes {stable_mosaic.version = 11 : i64} {
  func.func @_rmsnorm_kernel(%arg0: i32, %arg1: memref<32x256xbf16, #tpu.memory_space<vmem>>, %arg2: memref<1x256xf32, #tpu.memory_space<vmem>>, %arg3: memref<32x256xbf16, #tpu.memory_space<vmem>>) attributes {dimension_semantics = [#tpu.dimension_semantics<parallel>], iteration_bounds = array<i64: 4>, scalar_prefetch = 0 : i64, scratch_operands = 0 : i64, tpu.core_type = #tpu.core_type<tc>, window_params = [{transform_indices = @transform_0, window_bounds = array<i64: 32, 256>}, {pipeline_mode = #tpu.pipeline_mode<synchronous>, transform_indices = @transform_1, window_bounds = array<i64: 1, 256>}, {transform_indices = @transform_2, window_bounds = array<i64: 32, 256>}]} {
    %c0 = arith.constant 0 : index
    %c0_0 = arith.constant 0 : index
    %0 = vector.load %arg1[%c0, %c0_0] : memref<32x256xbf16, #tpu.memory_space<vmem>>, vector<32x256xbf16>
    %1 = arith.extf %0 : vector<32x256xbf16> to vector<32x256xf32>
    %2 = arith.mulf %1, %1 : vector<32x256xf32>
    %cst = arith.constant dense<0.000000e+00> : vector<32xf32>
    %3 = vector.multi_reduction <add>, %2, %cst [1] : vector<32x256xf32> to vector<32xf32>
    %4 = vector.shape_cast %3 : vector<32xf32> to vector<32x1xf32>
    %cst_1 = arith.constant 2.560000e+02 : f32
    %5 = vector.broadcast %cst_1 : f32 to vector<32x1xf32>
    %6 = arith.divf %4, %5 : vector<32x1xf32>
    %cst_2 = arith.constant 9.99999997E-7 : f32
    %7 = vector.broadcast %cst_2 : f32 to vector<32x1xf32>
    %8 = arith.addf %6, %7 : vector<32x1xf32>
    %9 = math.rsqrt %8 : vector<32x1xf32>
    %c0_3 = arith.constant 0 : index
    %c0_4 = arith.constant 0 : index
    %10 = vector.load %arg1[%c0_3, %c0_4] : memref<32x256xbf16, #tpu.memory_space<vmem>>, vector<32x256xbf16>
    %11 = arith.extf %10 : vector<32x256xbf16> to vector<32x256xf32>
    %12 = vector.broadcast %9 : vector<32x1xf32> to vector<32x256xf32>
    %13 = arith.mulf %11, %12 : vector<32x256xf32>
    %c0_5 = arith.constant 0 : index
    %c0_6 = arith.constant 0 : index
    %14 = vector.load %arg2[%c0_5, %c0_6] : memref<1x256xf32, #tpu.memory_space<vmem>>, vector<1x256xf32>
    %15 = vector.broadcast %14 : vector<1x256xf32> to vector<32x256xf32>
    %16 = arith.mulf %13, %15 : vector<32x256xf32>
    %17 = arith.truncf %16 : vector<32x256xf32> to vector<32x256xbf16>
    %c0_7 = arith.constant 0 : index
    %c0_8 = arith.constant 0 : index
    %18 = vector.load %arg3[%c0_7, %c0_8] : memref<32x256xbf16, #tpu.memory_space<vmem>>, vector<32x256xbf16>
    tpu.vector_store %arg3[%c0_7, %c0_8], %17 {strides = array<i32>} : memref<32x256xbf16, #tpu.memory_space<vmem>>, vector<32x256xbf16>,
    return
  }
  func.func @transform_0(%arg0: i32) -> (i32, i32) {
    %c0_i32 = arith.constant 0 : i32
    %c0_i32_0 = arith.constant 0 : i32
    return %arg0, %c0_i32 : i32, i32
  }
  func.func @transform_1(%arg0: i32) -> (i32, i32) {
    %c0_i32 = arith.constant 0 : i32
    %c0_i32_0 = arith.constant 0 : i32
    %c0_i32_1 = arith.constant 0 : i32
    return %c0_i32, %c0_i32_0 : i32, i32
  }
  func.func @transform_2(%arg0: i32) -> (i32, i32) {
    %c0_i32 = arith.constant 0 : i32
    %c0_i32_0 = arith.constant 0 : i32
    return %arg0, %c0_i32 : i32, i32
  }
}

</mosaic_0001>

<llo_original>
// kernel: tpu_custom_call.1
$region0: #{tpu_custom_call.1}
  #allocation0 [shape = 'u32[]', space=smem, size = 0x4, offset = 0x4, fixed_abs, tag = 'smem constant byte address 0x4 - core index']
  #allocation1 [shape = 'u32[144,128]{1,0:T(1,128)}', space=vmem, size = 0x12000, scoped, tag = 'internal scratch']
  %s0 = inlined_call_operand.hbm [shape: bf16[128,256], index: 0, kind: input, shape index: {}]
  %s1 = inlined_call_operand.hbm [shape: f32[1,256], index: 1, kind: input, shape index: {}]
  %s2 = inlined_call_operand.hbm [shape: bf16[128,256], index: 2, kind: output, shape index: {}]
  %s3 = sld [smem:[#allocation0]]
  $region49: #{tpu_custom_call.1} parent=0
    _
  %s5 = ssub.s32 1, %s3
  %s6 = scalar_select 0, %s5, %s3
  $region1: #{tpu_custom_call.1} parent=0
    #allocation2 [shape = 'u8[32768]{0}', space=vmem, size = 0x8000, scoped, tag = 'input window, operand 0']
    #allocation3 [shape = 's32[2]{0}', space=sflag, size = 0x8, scoped, tag = 'scoped memory for tpu_custom_call.1']
    #allocation4 [shape = 's32[2]{0}', space=sflag, size = 0x8, scoped, tag = 'scoped memory for tpu_custom_call.1']
    #allocation5 [shape = 'u8[1024]{0}', space=vmem, size = 0x400, scoped, tag = 'input window, operand 1, single buffered']
    #allocation6 [shape = 's32[1]{0}', space=sflag, size = 0x4, scoped, tag = 'scoped memory for tpu_custom_call.1']
    #allocation7 [shape = 'u8[32768]{0}', space=vmem, size = 0x8000, scoped, tag = 'output window, operand 0']
    %7 = vsyncpa [#allocation3], 0
    %s8 = scalar_lea.sflag [#allocation3], 1
    %9 = vsyncpa %s8, 0
    %10 = vsyncpa [#allocation6], 0
    %11 = vsyncpa [#allocation4], 0
    %s12 = scalar_lea.sflag [#allocation4], 1
    %13 = vsyncpa %s12, 0
    loop: start=0, step=1, limit=6
    $region2: #{tpu_custom_call.1} parent=1 // loop_pre_header
      _
    $region3: #{tpu_custom_call.1} parent=1 // loop_header
      %s15 = sphi 0, %s19
      %p16 = scmp.ge.s32.totalorder %s15, 6
      %s25 = sphi 0, %s27
      %s28 = sphi 0, %s25
      %s29 = sphi 0, %s28
      %s45 = sphi 0, %s29
      %s49 = sphi 0, %s49
      %s51 = sphi 0, %s49
      %s52 = sphi 0, %s51
      %s66 = sphi 0, %s52
      %s72 = sphi 0, %s74
      %s75 = sphi 0, %s72
      %s76 = sphi 0, %s75
      %s92 = sphi 0, %s76
    $region4: #{tpu_custom_call.1} parent=1 // loop_header_branch
      %18 = sbr.rel (%p16) target = $region8
    $region5: #{tpu_custom_call.1} parent=1 // loop_body
      %s20 = ssub.s32 %s15, 1
      %s21 = ssub.s32 %s15, 2
      %s22 = sadd.s32 %s15, 1
      %s23 = ssub.s32 %s15, %s22
      %p24 = scmp.eq.s32.totalorder %s23, 0
      %s26 = sadd.s32 %s25, 1
      %s27 = scalar_select %p24, %s25, %s26
      %p30 = pneg %p24
      %p31 = scmp.eq.s32.totalorder %s15, 3
      %p32 = por %p30, %p31
      %p33 = scmp.ne.s32.totalorder %s25, %s28
      %p34 = scmp.eq.s32.totalorder %s15, 0
      %p35 = por %p33, %p34
      %p36 = scmp.ne.s32.totalorder %s25, %s28
      %p37 = scmp.eq.s32.totalorder %s20, 3
      %p38 = por %p36, %p37
      %p39 = scmp.ne.s32.totalorder %s28, %s29
      %p40 = scmp.eq.s32.totalorder %s20, 0
      %p41 = por %p39, %p40
      %p42 = scmp.ne.s32.totalorder %s28, %s29
      %p43 = scmp.eq.s32.totalorder %s21, 3
      %p44 = por %p42, %p43
      %p46 = scmp.ne.s32.totalorder %s29, %s45
      %p47 = scmp.eq.s32.totalorder %s21, 0
      %p48 = por %p46, %p47
      %s50 = sadd.s32 %s49, 1
      %p53 = scmp.eq.s32.totalorder %s15, 3
      %p54 = scmp.ne.s32.totalorder %s49, %s51
      %p55 = scmp.eq.s32.totalorder %s15, 0
      %p56 = por %p54, %p55
      %p57 = scmp.ne.s32.totalorder %s49, %s51
      %p58 = scmp.eq.s32.totalorder %s20, 3
      %p59 = por %p57, %p58
      %p60 = scmp.ne.s32.totalorder %s51, %s52
      %p61 = scmp.eq.s32.totalorder %s20, 0
      %p62 = por %p60, %p61
      %p63 = scmp.ne.s32.totalorder %s51, %s52
      %p64 = scmp.eq.s32.totalorder %s21, 3
      %p65 = por %p63, %p64
      %p67 = scmp.ne.s32.totalorder %s52, %s66
      %p68 = scmp.eq.s32.totalorder %s21, 0
      %p69 = por %p67, %p68
      %s70 = ssub.s32 %s15, %s22
      %p71 = scmp.eq.s32.totalorder %s70, 0
      %s73 = sadd.s32 %s72, 1
      %s74 = scalar_select %p71, %s72, %s73
      %p77 = pneg %p71
      %p78 = scmp.eq.s32.totalorder %s15, 3
      %p79 = por %p77, %p78
      %p80 = scmp.ne.s32.totalorder %s72, %s75
      %p81 = scmp.eq.s32.totalorder %s15, 0
      %p82 = por %p80, %p81
      %p83 = scmp.ne.s32.totalorder %s72, %s75
      %p84 = scmp.eq.s32.totalorder %s20, 3
      %p85 = por %p83, %p84
      %p86 = scmp.ne.s32.totalorder %s75, %s76
      %p87 = scmp.eq.s32.totalorder %s20, 0
      %p88 = por %p86, %p87
      %p89 = scmp.ne.s32.totalorder %s75, %s76
      %p90 = scmp.eq.s32.totalorder %s21, 3
      %p91 = por %p89, %p90
      %p93 = scmp.ne.s32.totalorder %s76, %s92
      %p94 = scmp.eq.s32.totalorder %s21, 0
      %p95 = por %p93, %p94
      %p96 = scmp.le.s32.totalorder 1, %s15
      %p97 = scmp.lt.s32.totalorder %s15, 5
      %p98 = pnand %p96, %p97
      %p99 = pneg %p98
      // Predicated region
      $region9: #{tpu_custom_call.1} parent=5 // pred_check
        _
      $region10: #{tpu_custom_call.1} parent=5 // pred_check_branch
        %101 = sbr.rel (%p98) target = $region12
      $region11: #{tpu_custom_call.1} parent=5 // pred_region
        %s102 = ssub.s32 %s15, 1
        // Predicated region
        $region13: #{tpu_custom_call.1} parent=11 // pred_check
          %p103 = pneg %p62
        $region14: #{tpu_custom_call.1} parent=11 // pred_check_branch
          %105 = sbr.rel (%p103) target = $region16
        $region15: #{tpu_custom_call.1} parent=11 // pred_region
          %s107 = ssub.s32 32, 32
          %108 = vsyncadd [#allocation6], %s107
          %s110 = sshll.u32 [#allocation5], 4
          %s111 = int_to_ptr.vmem [resolvable:$true] %s110
          %113 = dma.hbm_to_vmem [thread:$0]  %s1, 32, %s111, [#allocation6]
        $region16: #{tpu_custom_call.1} parent=11 // pred_fallthru
          _
      $region12: #{tpu_custom_call.1} parent=5 // pred_fallthru
        _
      %p114 = scmp.lt.s32.totalorder %s15, 4
      // Predicated region
      $region17: #{tpu_custom_call.1} parent=5 // pred_check
        %p115 = pneg %p114
      $region18: #{tpu_custom_call.1} parent=5 // pred_check_branch
        %117 = sbr.rel (%p115) target = $region20
      $region19: #{tpu_custom_call.1} parent=5 // pred_region
        // Predicated region
        $region21: #{tpu_custom_call.1} parent=19 // pred_check
          %p118 = pneg %p35
        $region22: #{tpu_custom_call.1} parent=19 // pred_check_branch
          %120 = sbr.rel (%p118) target = $region24
        $region23: #{tpu_custom_call.1} parent=19 // pred_region
          %s121 = sand.u32 %s25, 1
          %s122 = scalar_lea.sflag [#allocation3], %s121
          %s123 = sand.u32 %s25, 1
          %s124 = smul.addr %s123, 32
          %s125 = scalar_lea.vmem [#allocation2], %s124
          %s126 = smul.u32 4, %s15
          %s128 = ssub.s32 512, 512
          %129 = vsyncadd %s122, %s128
          %s130 = smul.addr %s126, 2
          %s131 = smul.addr %s130, 64
          %s132 = scalar_lea.hbm %s0, %s131
          %s133 = sshll.u32 %s125, 4
          %s134 = int_to_ptr.vmem [resolvable:$true] %s133
          %139 = dma.hbm_to_vmem [thread:$0]  %s132, 512, %s134, %s122, 128, 128, 8
        $region24: #{tpu_custom_call.1} parent=19 // pred_fallthru
          _
      $region20: #{tpu_custom_call.1} parent=5 // pred_fallthru
        _
      %p140 = scmp.le.s32.totalorder 1, %s15
      %p141 = scmp.lt.s32.totalorder %s15, 5
      %p142 = pnand %p140, %p141
      %p143 = pneg %p142
      // Predicated region
      $region25: #{tpu_custom_call.1} parent=5 // pred_check
        _
      $region26: #{tpu_custom_call.1} parent=5 // pred_check_branch
        %145 = sbr.rel (%p142) target = $region28
      $region27: #{tpu_custom_call.1} parent=5 // pred_region
        %s146 = ssub.s32 %s15, 1
        %s147 = sand.u32 %s28, 1
        %s148 = scalar_lea.sflag [#allocation3], %s147
        %s149 = sand.u32 %s28, 1
        %s150 = smul.addr %s149, 32
        %s151 = scalar_lea.vmem [#allocation2], %s150
        // Predicated region
        $region29: #{tpu_custom_call.1} parent=27 // pred_check
          %p152 = pneg %p41
        $region30: #{tpu_custom_call.1} parent=27 // pred_check_branch
          %154 = sbr.rel (%p152) target = $region32
        $region31: #{tpu_custom_call.1} parent=27 // pred_region
          %155 = dma.done %s148, 512
        $region32: #{tpu_custom_call.1} parent=27 // pred_fallthru
          _
        // Predicated region
        $region33: #{tpu_custom_call.1} parent=27 // pred_check
          %p156 = pneg %p62
        $region34: #{tpu_custom_call.1} parent=27 // pred_check_branch
          %158 = sbr.rel (%p156) target = $region36
        $region35: #{tpu_custom_call.1} parent=27 // pred_region
          %159 = dma.done [#allocation6], 32
        $region36: #{tpu_custom_call.1} parent=27 // pred_fallthru
          _
        %s160 = sand.u32 %s28, 1
        %s161 = scalar_lea.sflag [#allocation3], %s160
        %s162 = sand.u32 %s28, 1
        %s163 = smul.addr %s162, 32
        %s164 = scalar_lea.vmem [#allocation2], %s163
        %p165 = pneg %p41
        %p166 = pneg %p38
        %p167 = pneg %p62
        %p168 = pneg %p59
        %p169 = pneg %p88
        %p170 = pneg %p85
        %s171 = sand.u32 %s75, 1
        %s172 = scalar_lea.sflag [#allocation4], %s171
        %s173 = sand.u32 %s75, 1
        %s174 = smul.addr %s173, 32
        %s175 = scalar_lea.vmem [#allocation7], %s174
        %s176 = smul.u32 4, %s20
        %s177 = smul.u32 4, %s20
        %v178 = vld [vmem:[%s151] sm:$0xff]
        %v179 = vld [vmem:[%s151 + $0x8] sm:$0xff]
        %v180 = vld [vmem:[%s151 + $0x10] sm:$0xff]
        %v181 = vld [vmem:[%s151 + $0x18] sm:$0xff]
        %v182 = vunpack.c.l.bf16 %v178
        %v183 = vunpack.c.h.bf16 %v178
        %v184 = vunpack.c.l.bf16 %v179
        %v185 = vunpack.c.h.bf16 %v179
        %v186 = vunpack.c.l.bf16 %v180
        %v187 = vunpack.c.h.bf16 %v180
        %v188 = vunpack.c.l.bf16 %v181
        %v189 = vunpack.c.h.bf16 %v181
        %v190 = vmul.f32 %v182, %v182
        %v191 = vmul.f32 %v183, %v183
        %v192 = vmul.f32 %v184, %v184
        %v193 = vmul.f32 %v185, %v185
        %v194 = vmul.f32 %v186, %v186
        %v195 = vmul.f32 %v187, %v187
        %v196 = vmul.f32 %v188, %v188
        %v197 = vmul.f32 %v189, %v189
        %v198 = vadd.f32 %v190, %v191
        %199 = vadd.xlane.f32.xlu0 %v198
        %v200 = vpop.xlane.xlu0 %199
        %v201 = vadd.f32 %v192, %v193
        %202 = vadd.xlane.f32.xlu0 %v201
        %v203 = vpop.xlane.xlu0 %202
        %v204 = vadd.f32 %v194, %v195
        %205 = vadd.xlane.f32.xlu0 %v204
        %v206 = vpop.xlane.xlu0 %205
        %v207 = vadd.f32 %v196, %v197
        %208 = vadd.xlane.f32.xlu0 %v207
        %v209 = vpop.xlane.xlu0 %208
        %v210 = vrcp.pop 256.0
        %v211 = vmul.f32 %v200, %v210
        %v212 = vmul.f32 %v203, %v210
        %v213 = vmul.f32 %v206, %v210
        %v214 = vmul.f32 %v209, %v210
        %v215 = vadd.f32 %v211, 1e-06
        %v216 = vadd.f32 %v212, 1e-06
        %v217 = vadd.f32 %v213, 1e-06
        %v218 = vadd.f32 %v214, 1e-06
        %v219 = vrsqrt.pop %v215
        %v220 = vrsqrt.pop %v216
        %v221 = vrsqrt.pop %v217
        %v222 = vrsqrt.pop %v218
        %v223 = vmul.f32 %v182, %v219
        %v224 = vmul.f32 %v183, %v219
        %v225 = vmul.f32 %v184, %v220
        %v226 = vmul.f32 %v185, %v220
        %v227 = vmul.f32 %v186, %v221
        %v228 = vmul.f32 %v187, %v221
        %v229 = vmul.f32 %v188, %v222
        %v230 = vmul.f32 %v189, %v222
        %v231 = vld [vmem:[#allocation5] sm:$0x3]
        %v233 = vlaneseq
        %v234 = vshrl.u32 %v233, 7
        %v235 = vsub.s32 0, %v234
        %v236 = vrot.slane %v231, %v235
        %v237 = vlaneseq
        %v238 = vshrl.u32 %v237, 7
        %v239 = vsub.s32 1, %v238
        %v240 = vrot.slane %v231, %v239
        %v243 = vmul.f32 %v223, %v236
        %v244 = vmul.f32 %v224, %v240
        %v245 = vmul.f32 %v225, %v236
        %v246 = vmul.f32 %v226, %v240
        %v247 = vmul.f32 %v227, %v236
        %v248 = vmul.f32 %v228, %v240
        %v249 = vmul.f32 %v229, %v236
        %v250 = vmul.f32 %v230, %v240
        %v251 = vpack.c.bf16 %v245, %v243
        %v252 = vpack.c.bf16 %v246, %v244
        %v253 = vpack.c.bf16 %v249, %v247
        %v254 = vpack.c.bf16 %v250, %v248
        %v259 = vunpack.c.l.b16 %v251
        %v260 = vunpack.c.l.b16 %v252
        %v261 = vunpack.c.h.b16 %v251
        %v262 = vunpack.c.h.b16 %v252
        %v263 = vunpack.c.l.b16 %v253
        %v264 = vunpack.c.l.b16 %v254
        %v265 = vunpack.c.h.b16 %v253
        %v266 = vunpack.c.h.b16 %v254
        %v267 = vpack.c.b16 %v260, %v259
        %v268 = vpack.c.b16 %v262, %v261
        %v269 = vpack.c.b16 %v264, %v263
        %v270 = vpack.c.b16 %v266, %v265
        %275 = vst [vmem:[%s175] sm:$0xff] %v267
        %276 = vst [vmem:[%s175 + $0x8] sm:$0xff] %v268
        %277 = vst [vmem:[%s175 + $0x10] sm:$0xff] %v269
        %278 = vst [vmem:[%s175 + $0x18] sm:$0xff] %v270
        %s279 = sand.u32 %s75, 1
        %s280 = scalar_lea.sflag [#allocation4], %s279
        %s281 = sand.u32 %s75, 1
        %s282 = smul.addr %s281, 32
        %s283 = scalar_lea.vmem [#allocation7], %s282
        // Predicated region
        $region37: #{tpu_custom_call.1} parent=27 // pred_check
          %p284 = pneg %p85
        $region38: #{tpu_custom_call.1} parent=27 // pred_check_branch
          %286 = sbr.rel (%p284) target = $region40
        $region39: #{tpu_custom_call.1} parent=27 // pred_region
          %s287 = smul.u32 4, %s20
          %s289 = ssub.s32 512, 512
          %290 = vsyncadd %s280, %s289
          %s291 = smul.addr %s287, 2
          %s292 = smul.addr %s291, 64
          %s293 = scalar_lea.hbm %s2, %s292
          %s294 = sshll.u32 %s283, 4
          %s295 = int_to_ptr.vmem [resolvable:$true] %s294
          %300 = dma.vmem_to_hbm [thread:$0]  %s295, 512, %s293, %s280, 128, 128, 8
        $region40: #{tpu_custom_call.1} parent=27 // pred_fallthru
          _
      $region28: #{tpu_custom_call.1} parent=5 // pred_fallthru
        _
      %p301 = scmp.le.s32.totalorder 2, %s15
      // Predicated region
      $region41: #{tpu_custom_call.1} parent=5 // pred_check
        %p302 = pneg %p301
      $region42: #{tpu_custom_call.1} parent=5 // pred_check_branch
        %304 = sbr.rel (%p302) target = $region44
      $region43: #{tpu_custom_call.1} parent=5 // pred_region
        %s305 = ssub.s32 %s15, 2
        // Predicated region
        $region45: #{tpu_custom_call.1} parent=43 // pred_check
          %p306 = pneg %p91
        $region46: #{tpu_custom_call.1} parent=43 // pred_check_branch
          %308 = sbr.rel (%p306) target = $region48
        $region47: #{tpu_custom_call.1} parent=43 // pred_region
          %s309 = sand.u32 %s76, 1
          %s310 = scalar_lea.sflag [#allocation4], %s309
          %s311 = sand.u32 %s76, 1
          %s312 = smul.addr %s311, 32
          %s313 = scalar_lea.vmem [#allocation7], %s312
          %314 = dma.done %s310, 512
        $region48: #{tpu_custom_call.1} parent=43 // pred_fallthru
          _
      $region44: #{tpu_custom_call.1} parent=5 // pred_fallthru
        _
    $region6: #{tpu_custom_call.1} parent=1 // loop_footer
      %s19 = sadd.s32 1, %s15
    $region7: #{tpu_custom_call.1} parent=1 // loop_footer_branch
      %14 = sbr.rel target = $region3
    $region8: #{tpu_custom_call.1} parent=1 // loop_exit
      _
    %315 = vsyncpa [#allocation3], 1
    %s316 = scalar_lea.sflag [#allocation3], 1
    %317 = vsyncpa %s316, 1
    %318 = vsyncpa [#allocation6], 1
    %319 = vsyncpa [#allocation4], 1
    %s320 = scalar_lea.sflag [#allocation4], 1
    %321 = vsyncpa %s320, 1

</llo_original>
